<compile_context>
chip_gen: v7x
topology: tpu7x:2x2x1
jax: 0.10.0
libtpu: 0.0.40
codegen_flags: <defaults>
</compile_context>

<pallas_src>
import functools

import jax
import jax.numpy as jnp
from jax.experimental import pallas as pl
from jax.experimental.pallas import tpu as pltpu


def _cnn_kernel(ids_ref, tblw_ref, cb_ref, fw_ref, fb_ref, out_ref,
                *, seq_len, conv_len):
    """Per-batch-tile kernel.

    ids_ref  : (TB*S, W) int32  shifted token ids (ids[t, w] = token at t+w,
                                 0 past the sequence end; masked before pool)
    tblw_ref : (W, V, Cp) bf16  folded tables tblw[w] = emb_table @ conv_w[w]
    cb_ref   : (1, Cp)   f32    conv bias (lane-padded)
    fw_ref   : (Cp, Op)  f32    fc weight (padded, transposed)
    fb_ref   : (1, Op)   f32    fc bias (padded)
    out_ref  : (TB, Op)  f32
    """
    TBS, W = ids_ref.shape
    S = seq_len
    TB = TBS // S
    V = tblw_ref.shape[1]
    Cp = tblw_ref.shape[2]

    ids = ids_ref[...]                                            # (TBS, W)
    vocab_iota = jax.lax.broadcasted_iota(jnp.int32, (TBS, V), 1)

    # Folded embedding+conv: acc[t, c] = sum_w tblw[w][ids[t, w], c].
    # One-hot row-select of a bf16 table is exact; accumulate across w in f32.
    onehot = (vocab_iota == ids[:, 0:1]).astype(jnp.bfloat16)     # (TBS, V)
    acc = jnp.dot(onehot, tblw_ref[0], preferred_element_type=jnp.float32)
    for w in range(1, W):                       # W is small & static (unrolled)
        onehot = (vocab_iota == ids[:, w:w + 1]).astype(jnp.bfloat16)
        acc = acc + jnp.dot(onehot, tblw_ref[w],
                            preferred_element_type=jnp.float32)
    acc = jnp.maximum(acc + cb_ref[...], 0.0)                     # bias + ReLU

    # Mask invalid tail rows and max-pool over time.  ReLU >= 0, so the zeroed
    # rows can never win the max.  (Reshape is free when S % 8 == 0.)
    acc = acc.reshape(TB, S, Cp)
    t_iota = jax.lax.broadcasted_iota(jnp.int32, (TB, S, Cp), 1)
    acc = jnp.where(t_iota < conv_len, acc, 0.0)
    pooled = jnp.max(acc, axis=1)                                 # (TB, Cp)

    # Dropout: identity (eval mode).  Final linear layer, f32 weights resident
    # in VMEM (no per-step cast).
    out = jnp.dot(pooled, fw_ref[...],
                  preferred_element_type=jnp.float32) + fb_ref[...]
    out_ref[...] = out.astype(out_ref.dtype)                      # lane-dense store


def _round_up(x, m):
    return ((x + m - 1) // m) * m


def cnn_forward(token_ids, emb_table, conv_w, conv_b, fc_w, fc_b,
                *, window_size=None, batch_block=256):
    """token_ids: (B, S) int.  Returns (B, output_dim) float32."""
    B, S = token_ids.shape
    V, E = emb_table.shape
    C = conv_w.shape[0]                 # PyTorch layout (C, 1, W, E)
    W = conv_w.shape[2]
    if window_size is not None:
        assert window_size == W
    O = fc_w.shape[0]                   # PyTorch layout (O, C)
    L = S - W + 1
    assert L >= 1, "sequence shorter than the conv window"
    assert V <= 4096, "one-hot / folded-table path is for small vocabularies"

    # Lane-dense padding of channel / output dims (sliced off below).
    Cp = _round_up(C, 128)
    Op = _round_up(O, 128)

    # --- one-time parameter re-layout + embedding/conv folding (plain JAX) ---
    cw = jnp.transpose(conv_w[:, 0, :, :], (1, 2, 0))             # (W, E, C)
    tblw = jnp.einsum('ve,wec->wvc',
                      emb_table.astype(jnp.float32), cw.astype(jnp.float32),
                      precision=jax.lax.Precision.HIGHEST)        # (W, V, C) f32
    tblw = jnp.pad(tblw, ((0, 0), (0, 0), (0, Cp - C))).astype(jnp.bfloat16)
    cb = jnp.pad(conv_b, (0, Cp - C)).reshape(1, Cp).astype(jnp.float32)
    fw = jnp.pad(fc_w.T, ((0, Cp - C), (0, Op - O))).astype(jnp.float32)
    fb = jnp.pad(fc_b, (0, Op - O)).reshape(1, Op).astype(jnp.float32)

    # --- batch tiling: TB samples per grid step ---
    # Bigger tiles amortize the ~0.35us/step overhead and raise MXU M on
    # single-TC v5e/v6e; on v7x large B still yields >= 2 parallel grid steps
    # so both TensorCores stay busy (dimension_semantics = "parallel").
    assert batch_block % 8 == 0
    TB = batch_block if B > batch_block else B
    nb = pl.cdiv(B, TB)
    B_pad = nb * TB

    ids = token_ids.astype(jnp.int32)
    if B_pad != B:
        ids = jnp.pad(ids, ((0, B_pad - B), (0, 0)))    # pad with token id 0
    # Shifted ids: ids_shift[b, t, w] = ids[b, t + w] (0 past the end; those
    # rows are masked in the kernel before the pool).
    idp = jnp.pad(ids, ((0, 0), (0, W - 1)))
    ids_shift = jnp.stack([idp[:, w:w + S] for w in range(W)], axis=-1)
    ids_shift = ids_shift.reshape(B_pad * S, W)

    kernel = functools.partial(_cnn_kernel, seq_len=S, conv_len=L)

    out_pad = pl.pallas_call(
        kernel,
        out_shape=jax.ShapeDtypeStruct((B_pad, Op), jnp.float32),
        grid_spec=pltpu.PrefetchScalarGridSpec(
            num_scalar_prefetch=0,
            grid=(nb,),
            in_specs=[
                pl.BlockSpec((TB * S, W), lambda b: (b, 0)),
                pl.BlockSpec((W, V, Cp), lambda b: (0, 0, 0)),
                pl.BlockSpec((1, Cp), lambda b: (0, 0)),
                pl.BlockSpec((Cp, Op), lambda b: (0, 0)),
                pl.BlockSpec((1, Op), lambda b: (0, 0)),
            ],
            out_specs=pl.BlockSpec((TB, Op), lambda b: (b, 0)),
        ),
        compiler_params=pltpu.CompilerParams(
            dimension_semantics=("parallel",),
            vmem_limit_bytes=32 * 1024 * 1024),
    )(ids_shift, tblw, cb, fw, fb)

    return out_pad[:B, :O]


if __name__ == "__main__":
    # Small, deterministic configuration consistent with the module.
    vocab_size = 32
    embedding_dim = 32
    out_channels = 8
    window_size = 3
    output_dim = 4
    batch = 2
    seq_len = 16

    key = jax.random.PRNGKey(0)
    k_tok, k_emb, k_cw, k_cb, k_fw, k_fb = jax.random.split(key, 6)

    token_ids = jax.random.randint(k_tok, (batch, seq_len), 0, vocab_size,
                                   dtype=jnp.int32)

    def bf16_round(x):
        # Weights reach the kernel via bf16 at some point; round here so the
        # references use identical values.
        return x.astype(jnp.bfloat16).astype(jnp.float32)

    # Embedding table; padding_idx=0 row zeroed like nn.Embedding.
    emb_table = bf16_round(0.1 * jax.random.normal(
        k_emb, (vocab_size, embedding_dim), jnp.float32))
    emb_table = emb_table.at[0].set(0.0)

    # Conv2d(1, out_channels, kernel=(window_size, embedding_dim)): PyTorch layout.
    conv_w = bf16_round(0.1 * jax.random.normal(
        k_cw, (out_channels, 1, window_size, embedding_dim), jnp.float32))
    conv_b = 0.1 * jax.random.normal(k_cb, (out_channels,), dtype=jnp.float32)

    # Linear(out_channels, output_dim): PyTorch layout (O, C).
    fc_w = bf16_round(0.1 * jax.random.normal(
        k_fw, (output_dim, out_channels), jnp.float32))
    fc_b = 0.1 * jax.random.normal(k_fb, (output_dim,), dtype=jnp.float32)

    out = cnn_forward(token_ids, emb_table, conv_w, conv_b, fc_w, fc_b,
                      window_size=window_size)
    jax.block_until_ready(out)
    assert out.shape == (batch, output_dim)

    L = seq_len - window_size + 1

    # (1) Module-semantics reference (f32 embedding -> conv -> relu -> pool -> fc).
    #     The kernel keeps the folded (embedding @ conv) table in bf16, so this
    #     comparison is bf16-tight rather than f32-tight.
    embedded = jnp.take(emb_table, token_ids, axis=0)             # (B, S, E)
    windows = jnp.stack([embedded[:, t:t + window_size, :] for t in range(L)],
                        axis=1)                                   # (B, L, W, E)
    fm = jnp.einsum('blwe,cwe->bcl', windows, conv_w[:, 0],
                    precision=jax.lax.Precision.HIGHEST) + conv_b[None, :, None]
    pooled = jnp.max(jax.nn.relu(fm), axis=2)
    ref = jnp.dot(pooled, fc_w.T,
                  precision=jax.lax.Precision.HIGHEST) + fc_b
    assert jnp.allclose(out, ref, atol=2e-2), (out, ref)

    # (2) Tight check against the folded-bf16 math the kernel actually runs.
    cw_wec = jnp.transpose(conv_w[:, 0], (1, 2, 0))               # (W, E, C)
    tblw_ref = jnp.einsum('ve,wec->wvc', emb_table, cw_wec,
                          precision=jax.lax.Precision.HIGHEST)
    tblw_ref = tblw_ref.astype(jnp.bfloat16).astype(jnp.float32)  # (W, V, C)
    fm2 = jnp.zeros((batch, L, out_channels), jnp.float32)
    for w in range(window_size):
        fm2 = fm2 + tblw_ref[w][token_ids[:, w:w + L]]            # (B, L, C)
    fm2 = fm2 + conv_b[None, None, :]
    pooled2 = jnp.max(jax.nn.relu(fm2), axis=1)                   # (B, C)
    ref2 = jnp.dot(pooled2, fc_w.T,
                   precision=jax.lax.Precision.HIGHEST) + fc_b
    assert jnp.allclose(out, ref2, atol=1e-4), (out, ref2)

    print("KERNEL_OK")
</pallas_src>

<mosaic_0001>
module attributes {stable_mosaic.version = 11 : i64} {
  func.func @_cnn_kernel(%arg0: i32, %arg1: memref<32x3xi32, #tpu.memory_space<vmem>>, %arg2: memref<3x32x128xbf16, #tpu.memory_space<vmem>>, %arg3: memref<1x128xf32, #tpu.memory_space<vmem>>, %arg4: memref<128x128xf32, #tpu.memory_space<vmem>>, %arg5: memref<1x128xf32, #tpu.memory_space<vmem>>, %arg6: memref<2x128xf32, #tpu.memory_space<vmem>>) attributes {dimension_semantics = [#tpu.dimension_semantics<parallel>], iteration_bounds = array<i64: 1>, scalar_prefetch = 0 : i64, scratch_operands = 0 : i64, tpu.core_type = #tpu.core_type<tc>, window_params = [{transform_indices = @transform_0, window_bounds = array<i64: 32, 3>}, {pipeline_mode = #tpu.pipeline_mode<synchronous>, transform_indices = @transform_1, window_bounds = array<i64: 3, 32, 128>}, {pipeline_mode = #tpu.pipeline_mode<synchronous>, transform_indices = @transform_2, window_bounds = array<i64: 1, 128>}, {pipeline_mode = #tpu.pipeline_mode<synchronous>, transform_indices = @transform_3, window_bounds = array<i64: 128, 128>}, {pipeline_mode = #tpu.pipeline_mode<synchronous>, transform_indices = @transform_4, window_bounds = array<i64: 1, 128>}, {transform_indices = @transform_5, window_bounds = array<i64: 2, 128>}]} {
    %c0 = arith.constant 0 : index
    %c0_0 = arith.constant 0 : index
    %0 = vector.load %arg1[%c0, %c0_0] : memref<32x3xi32, #tpu.memory_space<vmem>>, vector<32x3xi32>
    %1 = tpu.iota {dimensions = array<i32: 1>} : vector<32x32xi32>
    %2 = vector.extract_strided_slice %0 {offsets = [0, 0], sizes = [32, 1], strides = [1, 1]} : vector<32x3xi32> to vector<32x1xi32>
    %3 = vector.broadcast %2 : vector<32x1xi32> to vector<32x32xi32>
    %4 = arith.cmpi eq, %1, %3 : vector<32x32xi32>
    %5 = arith.extui %4 : vector<32x32xi1> to vector<32x32xi32>
    %6 = arith.sitofp %5 : vector<32x32xi32> to vector<32x32xf32>
    %7 = arith.truncf %6 : vector<32x32xf32> to vector<32x32xbf16>
    %c0_1 = arith.constant 0 : index
    %c0_2 = arith.constant 0 : index
    %c0_3 = arith.constant 0 : index
    %8 = vector.load %arg2[%c0_1, %c0_2, %c0_3] : memref<3x32x128xbf16, #tpu.memory_space<vmem>>, vector<1x32x128xbf16>
    %9 = vector.shape_cast %8 : vector<1x32x128xbf16> to vector<32x128xbf16>
    %cst = arith.constant dense<0.000000e+00> : vector<32x128xf32>
    %10 = tpu.matmul %7, %9, %cst {dimension_numbers = #tpu.dot_dimension_numbers<[1], [0], [0], [1], [0, 0, 1, 1], [], []>} : vector<32x32xbf16>, vector<32x128xbf16>, vector<32x128xf32> -> vector<32x128xf32>
    %11 = vector.extract_strided_slice %0 {offsets = [0, 1], sizes = [32, 1], strides = [1, 1]} : vector<32x3xi32> to vector<32x1xi32>
    %12 = vector.broadcast %11 : vector<32x1xi32> to vector<32x32xi32>
    %13 = arith.cmpi eq, %1, %12 : vector<32x32xi32>
    %14 = arith.extui %13 : vector<32x32xi1> to vector<32x32xi32>
    %15 = arith.sitofp %14 : vector<32x32xi32> to vector<32x32xf32>
    %16 = arith.truncf %15 : vector<32x32xf32> to vector<32x32xbf16>
    %c1 = arith.constant 1 : index
    %c0_4 = arith.constant 0 : index
    %c0_5 = arith.constant 0 : index
    %17 = vector.load %arg2[%c1, %c0_4, %c0_5] : memref<3x32x128xbf16, #tpu.memory_space<vmem>>, vector<1x32x128xbf16>
    %18 = vector.shape_cast %17 : vector<1x32x128xbf16> to vector<32x128xbf16>
    %cst_6 = arith.constant dense<0.000000e+00> : vector<32x128xf32>
    %19 = tpu.matmul %16, %18, %cst_6 {dimension_numbers = #tpu.dot_dimension_numbers<[1], [0], [0], [1], [0, 0, 1, 1], [], []>} : vector<32x32xbf16>, vector<32x128xbf16>, vector<32x128xf32> -> vector<32x128xf32>
    %20 = arith.addf %10, %19 : vector<32x128xf32>
    %21 = vector.extract_strided_slice %0 {offsets = [0, 2], sizes = [32, 1], strides = [1, 1]} : vector<32x3xi32> to vector<32x1xi32>
    %22 = vector.broadcast %21 : vector<32x1xi32> to vector<32x32xi32>
    %23 = arith.cmpi eq, %1, %22 : vector<32x32xi32>
    %24 = arith.extui %23 : vector<32x32xi1> to vector<32x32xi32>
    %25 = arith.sitofp %24 : vector<32x32xi32> to vector<32x32xf32>
    %26 = arith.truncf %25 : vector<32x32xf32> to vector<32x32xbf16>
    %c2 = arith.constant 2 : index
    %c0_7 = arith.constant 0 : index
    %c0_8 = arith.constant 0 : index
    %27 = vector.load %arg2[%c2, %c0_7, %c0_8] : memref<3x32x128xbf16, #tpu.memory_space<vmem>>, vector<1x32x128xbf16>
    %28 = vector.shape_cast %27 : vector<1x32x128xbf16> to vector<32x128xbf16>
    %cst_9 = arith.constant dense<0.000000e+00> : vector<32x128xf32>
    %29 = tpu.matmul %26, %28, %cst_9 {dimension_numbers = #tpu.dot_dimension_numbers<[1], [0], [0], [1], [0, 0, 1, 1], [], []>} : vector<32x32xbf16>, vector<32x128xbf16>, vector<32x128xf32> -> vector<32x128xf32>
    %30 = arith.addf %20, %29 : vector<32x128xf32>
    %c0_10 = arith.constant 0 : index
    %c0_11 = arith.constant 0 : index
    %31 = vector.load %arg3[%c0_10, %c0_11] : memref<1x128xf32, #tpu.memory_space<vmem>>, vector<1x128xf32>
    %32 = vector.broadcast %31 : vector<1x128xf32> to vector<32x128xf32>
    %33 = arith.addf %30, %32 : vector<32x128xf32>
    %cst_12 = arith.constant 0.000000e+00 : f32
    %34 = vector.broadcast %cst_12 : f32 to vector<32x128xf32>
    %35 = arith.maximumf %33, %34 : vector<32x128xf32>
    %36 = vector.shape_cast %35 : vector<32x128xf32> to vector<2x16x128xf32>
    %37 = tpu.iota {dimensions = array<i32: 1>} : vector<2x16x128xi32>
    %c14_i32 = arith.constant 14 : i32
    %38 = vector.broadcast %c14_i32 : i32 to vector<2x16x128xi32>
    %39 = arith.cmpi slt, %37, %38 : vector<2x16x128xi32>
    %cst_13 = arith.constant 0.000000e+00 : f32
    %40 = vector.broadcast %cst_13 : f32 to vector<2x16x128xf32>
    %41 = arith.select %39, %36, %40 : vector<2x16x128xi1>, vector<2x16x128xf32>
    %cst_14 = arith.constant dense<0xFF800000> : vector<2x128xf32>
    %42 = vector.multi_reduction <maximumf>, %41, %cst_14 [1] : vector<2x16x128xf32> to vector<2x128xf32>
    %c0_15 = arith.constant 0 : index
    %c0_16 = arith.constant 0 : index
    %43 = vector.load %arg4[%c0_15, %c0_16] : memref<128x128xf32, #tpu.memory_space<vmem>>, vector<128x128xf32>
    %cst_17 = arith.constant dense<0.000000e+00> : vector<2x128xf32>
    %44 = tpu.matmul %42, %43, %cst_17 {dimension_numbers = #tpu.dot_dimension_numbers<[1], [0], [0], [1], [0, 0, 1, 1], [], []>} : vector<2x128xf32>, vector<128x128xf32>, vector<2x128xf32> -> vector<2x128xf32>
    %c0_18 = arith.constant 0 : index
    %c0_19 = arith.constant 0 : index
    %45 = vector.load %arg5[%c0_18, %c0_19] : memref<1x128xf32, #tpu.memory_space<vmem>>, vector<1x128xf32>
    %46 = vector.broadcast %45 : vector<1x128xf32> to vector<2x128xf32>
    %47 = arith.addf %44, %46 : vector<2x128xf32>
    %c0_20 = arith.constant 0 : index
    %c0_21 = arith.constant 0 : index
    %48 = vector.load %arg6[%c0_20, %c0_21] : memref<2x128xf32, #tpu.memory_space<vmem>>, vector<2x128xf32>
    tpu.vector_store %arg6[%c0_20, %c0_21], %47 {strides = array<i32>} : memref<2x128xf32, #tpu.memory_space<vmem>>, vector<2x128xf32>,
    return
  }
  func.func @transform_0(%arg0: i32) -> (i32, i32) {
    %c0_i32 = arith.constant 0 : i32
    %c0_i32_0 = arith.constant 0 : i32
    return %arg0, %c0_i32 : i32, i32
  }
  func.func @transform_1(%arg0: i32) -> (i32, i32, i32) {
    %c0_i32 = arith.constant 0 : i32
    %c0_i32_0 = arith.constant 0 : i32
    %c0_i32_1 = arith.constant 0 : i32
    %c0_i32_2 = arith.constant 0 : i32
    return %c0_i32, %c0_i32_0, %c0_i32_1 : i32, i32, i32
  }
  func.func @transform_2(%arg0: i32) -> (i32, i32) {
    %c0_i32 = arith.constant 0 : i32
    %c0_i32_0 = arith.constant 0 : i32
    %c0_i32_1 = arith.constant 0 : i32
    return %c0_i32, %c0_i32_0 : i32, i32
  }
  func.func @transform_3(%arg0: i32) -> (i32, i32) {
    %c0_i32 = arith.constant 0 : i32
    %c0_i32_0 = arith.constant 0 : i32
    %c0_i32_1 = arith.constant 0 : i32
    return %c0_i32, %c0_i32_0 : i32, i32
  }
  func.func @transform_4(%arg0: i32) -> (i32, i32) {
    %c0_i32 = arith.constant 0 : i32
    %c0_i32_0 = arith.constant 0 : i32
    %c0_i32_1 = arith.constant 0 : i32
    return %c0_i32, %c0_i32_0 : i32, i32
  }
  func.func @transform_5(%arg0: i32) -> (i32, i32) {
    %c0_i32 = arith.constant 0 : i32
    %c0_i32_0 = arith.constant 0 : i32
    return %arg0, %c0_i32 : i32, i32
  }
}

</mosaic_0001>

<llo_original>
// kernel: tpu_custom_call.1
$region0: #{tpu_custom_call.1}
  #allocation0 [shape = 'u32[]', space=smem, size = 0x4, offset = 0x4, fixed_abs, tag = 'smem constant byte address 0x4 - core index']
  #allocation1 [shape = 'u32[144,128]{1,0:T(1,128)}', space=vmem, size = 0x12000, scoped, tag = 'internal scratch']
  %s0 = inlined_call_operand.vmem [shape: s32[32,3], index: 0, kind: input, shape index: {}]
  %s1 = inlined_call_operand.hbm [shape: bf16[3,32,128], index: 1, kind: input, shape index: {}]
  %s2 = inlined_call_operand.vmem [shape: f32[1,128], index: 2, kind: input, shape index: {}]
  %s3 = inlined_call_operand.hbm [shape: f32[128,128], index: 3, kind: input, shape index: {}]
  %s4 = inlined_call_operand.vmem [shape: f32[1,128], index: 4, kind: input, shape index: {}]
  %s5 = inlined_call_operand.hbm [shape: f32[2,128], index: 5, kind: output, shape index: {}]
  %s6 = sld [smem:[#allocation0]]
  $region38: #{tpu_custom_call.1} parent=0
    _
  %s8 = ssub.s32 1, %s6
  %s9 = scalar_select 0, %s8, %s6
  $region1: #{tpu_custom_call.1} parent=0
    #allocation2 [shape = 'u8[24576]{0}', space=vmem, size = 0x6000, scoped, tag = 'input window, operand 1, single buffered']
    #allocation3 [shape = 's32[1]{0}', space=sflag, size = 0x4, scoped, tag = 'scoped memory for tpu_custom_call.1']
    #allocation4 [shape = 's32[1]{0}', space=sflag, size = 0x4, scoped, tag = 'scoped memory for tpu_custom_call.1']
    #allocation5 [shape = 'u8[65536]{0}', space=vmem, size = 0x10000, scoped, tag = 'input window, operand 3, single buffered']
    #allocation6 [shape = 's32[1]{0}', space=sflag, size = 0x4, scoped, tag = 'scoped memory for tpu_custom_call.1']
    #allocation7 [shape = 'u8[1024]{0}', space=vmem, size = 0x400, scoped, tag = 'output window, operand 0, single buffered']
    %10 = vsyncpa [#allocation3], 0
    %11 = vsyncpa [#allocation6], 0
    %12 = vsyncpa [#allocation4], 0
    // Predicated region
    $region2: #{tpu_custom_call.1} parent=1 // pred_check
      _
    $region3: #{tpu_custom_call.1} parent=1 // pred_check_branch
      %14 = sbr.rel (0) target = $region5
    $region4: #{tpu_custom_call.1} parent=1 // pred_region
      _
    $region5: #{tpu_custom_call.1} parent=1 // pred_fallthru
      _
    // Predicated region
    $region6: #{tpu_custom_call.1} parent=1 // pred_check
      _
    $region7: #{tpu_custom_call.1} parent=1 // pred_check_branch
      %16 = sbr.rel (0) target = $region9
    $region8: #{tpu_custom_call.1} parent=1 // pred_region
      %s18 = ssub.s32 768, 768
      %19 = vsyncadd [#allocation3], %s18
      %s20 = sshll.u32 [#allocation2], 4
      %s21 = int_to_ptr.vmem [resolvable:$true] %s20
      %26 = dma.hbm_to_vmem [thread:$0]  %s1, 768, %s21, [#allocation3], 64, 64, 4
    $region9: #{tpu_custom_call.1} parent=1 // pred_fallthru
      _
    // Predicated region
    $region10: #{tpu_custom_call.1} parent=1 // pred_check
      _
    $region11: #{tpu_custom_call.1} parent=1 // pred_check_branch
      %28 = sbr.rel (0) target = $region13
    $region12: #{tpu_custom_call.1} parent=1 // pred_region
      _
    $region13: #{tpu_custom_call.1} parent=1 // pred_fallthru
      _
    // Predicated region
    $region14: #{tpu_custom_call.1} parent=1 // pred_check
      _
    $region15: #{tpu_custom_call.1} parent=1 // pred_check_branch
      %30 = sbr.rel (0) target = $region17
    $region16: #{tpu_custom_call.1} parent=1 // pred_region
      %s32 = ssub.s32 2048, 2048
      %33 = vsyncadd [#allocation6], %s32
      %s34 = sshll.u32 [#allocation5], 4
      %s35 = int_to_ptr.vmem [resolvable:$true] %s34
      %40 = dma.hbm_to_vmem [thread:$0]  %s3, 2048, %s35, [#allocation6], 128, 128, 8
    $region17: #{tpu_custom_call.1} parent=1 // pred_fallthru
      _
    // Predicated region
    $region18: #{tpu_custom_call.1} parent=1 // pred_check
      _
    $region19: #{tpu_custom_call.1} parent=1 // pred_check_branch
      %42 = sbr.rel (0) target = $region21
    $region20: #{tpu_custom_call.1} parent=1 // pred_region
      _
    $region21: #{tpu_custom_call.1} parent=1 // pred_fallthru
      _
    // Predicated region
    $region22: #{tpu_custom_call.1} parent=1 // pred_check
      _
    $region23: #{tpu_custom_call.1} parent=1 // pred_check_branch
      %44 = sbr.rel (0) target = $region25
    $region24: #{tpu_custom_call.1} parent=1 // pred_region
      %45 = dma.done [#allocation3], 768
    $region25: #{tpu_custom_call.1} parent=1 // pred_fallthru
      _
    // Predicated region
    $region26: #{tpu_custom_call.1} parent=1 // pred_check
      _
    $region27: #{tpu_custom_call.1} parent=1 // pred_check_branch
      %47 = sbr.rel (0) target = $region29
    $region28: #{tpu_custom_call.1} parent=1 // pred_region
      %48 = dma.done [#allocation6], 2048
    $region29: #{tpu_custom_call.1} parent=1 // pred_fallthru
      _
    %v50 = vld [vmem:[%s0] sm:$0xff]
    %v51 = vld [vmem:[%s0 + $0x8] sm:$0xff]
    %v52 = vld [vmem:[%s0 + $0x10] sm:$0xff]
    %v53 = vld [vmem:[%s0 + $0x18] sm:$0xff]
    %v54 = vlaneseq
    %v55 = vand.u32 %v54, 127
    %56 = vset.pattern.permute.xlu0 0
    %57 = vperm.xlu0 %56, %v50
    %v58 = vpop.permute.xlu0 %57
    %59 = vset.pattern.permute.xlu0 0
    %60 = vperm.xlu0 %59, %v51
    %v61 = vpop.permute.xlu0 %60
    %62 = vset.pattern.permute.xlu0 0
    %63 = vperm.xlu0 %62, %v52
    %v64 = vpop.permute.xlu0 %63
    %65 = vset.pattern.permute.xlu0 0
    %66 = vperm.xlu0 %65, %v53
    %v67 = vpop.permute.xlu0 %66
    %vm68 = vcmp.eq.s32.totalorder %v55, %v58
    %vm69 = vcmp.eq.s32.totalorder %v55, %v61
    %vm70 = vcmp.eq.s32.totalorder %v55, %v64
    %vm71 = vcmp.eq.s32.totalorder %v55, %v67
    %v72 = vsel %vm68, 1, 0
    %v73 = vsel %vm69, 1, 0
    %v74 = vsel %vm70, 1, 0
    %v75 = vsel %vm71, 1, 0
    %v76 = vcvt.s32.f32 %v72
    %v77 = vcvt.s32.f32 %v73
    %v78 = vcvt.s32.f32 %v74
    %v79 = vcvt.s32.f32 %v75
    %v80 = vpack.c.bf16 %v77, %v76
    %v81 = vpack.c.bf16 %v79, %v78
    %v82 = vld [vmem:[#allocation2] sm:$0xf]
    %v83 = vld [vmem:[#allocation2 + $0x4] sm:$0xf]
    %v84 = vld [vmem:[#allocation2 + $0x8] sm:$0xf]
    %v85 = vld [vmem:[#allocation2 + $0xc] sm:$0xf]
    %86 = vset.pattern.permute.xlu0 1
    %87 = vperm.xlu0 %86, %v50
    %v88 = vpop.permute.xlu0 %87
    %89 = vset.pattern.permute.xlu0 1
    %90 = vperm.xlu0 %89, %v51
    %v91 = vpop.permute.xlu0 %90
    %92 = vset.pattern.permute.xlu0 1
    %93 = vperm.xlu0 %92, %v52
    %v94 = vpop.permute.xlu0 %93
    %95 = vset.pattern.permute.xlu0 1
    %96 = vperm.xlu0 %95, %v53
    %v97 = vpop.permute.xlu0 %96
    %vm98 = vcmp.eq.s32.totalorder %v55, %v88
    %vm99 = vcmp.eq.s32.totalorder %v55, %v91
    %vm100 = vcmp.eq.s32.totalorder %v55, %v94
    %vm101 = vcmp.eq.s32.totalorder %v55, %v97
    %v102 = vsel %vm98, 1, 0
    %v103 = vsel %vm99, 1, 0
    %v104 = vsel %vm100, 1, 0
    %v105 = vsel %vm101, 1, 0
    %v106 = vcvt.s32.f32 %v102
    %v107 = vcvt.s32.f32 %v103
    %v108 = vcvt.s32.f32 %v104
    %v109 = vcvt.s32.f32 %v105
    %v110 = vpack.c.bf16 %v107, %v106
    %v111 = vpack.c.bf16 %v109, %v108
    %s112 = scalar_lea.vmem [#allocation2], 16
    %v113 = vld [vmem:[%s112] sm:$0xf]
    %v114 = vld [vmem:[%s112 + $0x4] sm:$0xf]
    %v115 = vld [vmem:[%s112 + $0x8] sm:$0xf]
    %v116 = vld [vmem:[%s112 + $0xc] sm:$0xf]
    %v121 = vunpack.c.l.b16 %v113
    %v122 = vunpack.c.l.b16 %v114
    %v123 = vunpack.c.l.b16 %v115
    %v124 = vunpack.c.l.b16 %v116
    %v125 = vpack.c.b16 %v122, %v121
    %v126 = vpack.c.b16 %v124, %v123
    %vm129 = vcmask 261120
    %v131 = vsel %vm129, %v110, 0
    %v134 = vsel %vm129, %v111, 0
    %136 = vmatprep.subr.bf16.mxu0 0
    %137 = vmatpush1.bf16.msra.mxu0 %v125
    %138 = vmatprep.subr.bf16.mxu0 0
    %139 = vmatpush1.bf16.msra.mxu0 %v126
    %140 = vmatprep.subr.bf16.mxu0 0
    %141 = vmatpush1.bf16.msra.mxu0 0
    %142 = vmatprep.subr.bf16.mxu0 0
    %143 = vmatpush1.bf16.msra.mxu0 0
    %144 = vmatprep.subr.bf16.mxu0 0
    %145 = vmatpush1.bf16.msra.mxu0 0
    %146 = vmatprep.subr.bf16.mxu0 0
    %147 = vmatpush1.bf16.msra.mxu0 0
    %148 = vmatprep.subr.bf16.mxu0 0
    %149 = vmatpush1.bf16.msra.mxu0 0
    %150 = vmatprep.subr.bf16.mxu0 0
    %151 = vmatpush1.bf16.msra.mxu0 0
    %152 = vmatprep.subr.bf16.mxu0 0
    %153 = vmatpush1.bf16.msra.mxu0 0
    %154 = vmatprep.subr.bf16.mxu0 0
    %155 = vmatpush1.bf16.msra.mxu0 0
    %156 = vmatprep.subr.bf16.mxu0 0
    %157 = vmatpush1.bf16.msra.mxu0 0
    %158 = vmatprep.subr.bf16.mxu0 0
    %159 = vmatpush1.bf16.msra.mxu0 0
    %160 = vmatprep.subr.bf16.mxu0 0
    %161 = vmatpush1.bf16.msra.mxu0 0
    %162 = vmatprep.subr.bf16.mxu0 0
    %163 = vmatpush1.bf16.msra.mxu0 0
    %164 = vmatprep.subr.bf16.mxu0 0
    %165 = vmatpush1.bf16.msra.mxu0 0
    %166 = vmatprep.subr.bf16.mxu0 0
    %167 = vmatpush1.bf16.msra.mxu0 0
    %168 = vmatprep.mubr.bf16.mxu0 0
    %169 = vmatmul.mubr.bf16.gmra.mrb[0].mxu0 %v131
    %v170 = vpop.f32.mrb[0].mxu0
    %v171 = vadd.f32 0.0, %v170
    %v172 = vpop.f32.mrb[0].mxu0
    %v173 = vpop.f32.mrb[0].mxu0
    %v174 = vadd.f32 0.0, %v173
    %v175 = vpop.f32.mrb[0].mxu0
    %176 = vmatprep.mubr.bf16.mxu0 0
    %177 = vmatmul.mubr.bf16.gmra.mrb[0].mxu0 %v134
    %v178 = vpop.f32.mrb[0].mxu0
    %v179 = vadd.f32 0.0, %v178
    %v180 = vpop.f32.mrb[0].mxu0
    %v181 = vpop.f32.mrb[0].mxu0
    %v182 = vadd.f32 0.0, %v181
    %v183 = vpop.f32.mrb[0].mxu0
    %184 = vdwg.mxu0
    %v189 = vunpack.c.l.b16 %v82
    %v190 = vunpack.c.l.b16 %v83
    %v191 = vunpack.c.l.b16 %v84
    %v192 = vunpack.c.l.b16 %v85
    %v193 = vpack.c.b16 %v190, %v189
    %v194 = vpack.c.b16 %v192, %v191
    %v198 = vsel %vm129, %v80, 0
    %v201 = vsel %vm129, %v81, 0
    %203 = vmatprep.subr.bf16.mxu0 0
    %204 = vmatpush1.bf16.msra.mxu0 %v193
    %205 = vmatprep.subr.bf16.mxu0 0
    %206 = vmatpush1.bf16.msra.mxu0 %v194
    %207 = vmatprep.subr.bf16.mxu0 0
    %208 = vmatpush1.bf16.msra.mxu0 0
    %209 = vmatprep.subr.bf16.mxu0 0
    %210 = vmatpush1.bf16.msra.mxu0 0
    %211 = vmatprep.subr.bf16.mxu0 0
    %212 = vmatpush1.bf16.msra.mxu0 0
    %213 = vmatprep.subr.bf16.mxu0 0
    %214 = vmatpush1.bf16.msra.mxu0 0
    %215 = vmatprep.subr.bf16.mxu0 0
    %216 = vmatpush1.bf16.msra.mxu0 0
    %217 = vmatprep.subr.bf16.mxu0 0
    %218 = vmatpush1.bf16.msra.mxu0 0
    %219 = vmatprep.subr.bf16.mxu0 0
    %220 = vmatpush1.bf16.msra.mxu0 0
    %221 = vmatprep.subr.bf16.mxu0 0
    %222 = vmatpush1.bf16.msra.mxu0 0
    %223 = vmatprep.subr.bf16.mxu0 0
    %224 = vmatpush1.bf16.msra.mxu0 0
    %225 = vmatprep.subr.bf16.mxu0 0
    %226 = vmatpush1.bf16.msra.mxu0 0
    %227 = vmatprep.subr.bf16.mxu0 0
    %228 = vmatpush1.bf16.msra.mxu0 0
    %229 = vmatprep.subr.bf16.mxu0 0
    %230 = vmatpush1.bf16.msra.mxu0 0
    %231 = vmatprep.subr.bf16.mxu0 0
    %232 = vmatpush1.bf16.msra.mxu0 0
    %233 = vmatprep.subr.bf16.mxu0 0
    %234 = vmatpush1.bf16.msra.mxu0 0
    %235 = vmatprep.mubr.bf16.mxu0 0
    %236 = vmatmul.mubr.bf16.gmra.mrb[0].mxu0 %v198
    %v237 = vpop.f32.mrb[0].mxu0
    %v238 = vadd.f32 %v171, %v237
    %v239 = vpop.f32.mrb[0].mxu0
    %v240 = vpop.f32.mrb[0].mxu0
    %v241 = vadd.f32 %v174, %v240
    %v242 = vpop.f32.mrb[0].mxu0
    %243 = vmatprep.mubr.bf16.mxu0 0
    %244 = vmatmul.mubr.bf16.gmra.mrb[0].mxu0 %v201
    %v245 = vpop.f32.mrb[0].mxu0
    %v246 = vadd.f32 %v179, %v245
    %v247 = vpop.f32.mrb[0].mxu0
    %v248 = vpop.f32.mrb[0].mxu0
    %v249 = vadd.f32 %v182, %v248
    %v250 = vpop.f32.mrb[0].mxu0
    %251 = vdwg.mxu0
    %252 = vset.pattern.permute.xlu0 2
    %253 = vperm.xlu0 %252, %v50
    %v254 = vpop.permute.xlu0 %253
    %255 = vset.pattern.permute.xlu0 2
    %256 = vperm.xlu0 %255, %v51
    %v257 = vpop.permute.xlu0 %256
    %258 = vset.pattern.permute.xlu0 2
    %259 = vperm.xlu0 %258, %v52
    %v260 = vpop.permute.xlu0 %259
    %261 = vset.pattern.permute.xlu0 2
    %262 = vperm.xlu0 %261, %v53
    %v263 = vpop.permute.xlu0 %262
    %vm264 = vcmp.eq.s32.totalorder %v55, %v254
    %vm265 = vcmp.eq.s32.totalorder %v55, %v257
    %vm266 = vcmp.eq.s32.totalorder %v55, %v260
    %vm267 = vcmp.eq.s32.totalorder %v55, %v263
    %v268 = vsel %vm264, 1, 0
    %v269 = vsel %vm265, 1, 0
    %v270 = vsel %vm266, 1, 0
    %v271 = vsel %vm267, 1, 0
    %v272 = vcvt.s32.f32 %v268
    %v273 = vcvt.s32.f32 %v269
    %v274 = vcvt.s32.f32 %v270
    %v275 = vcvt.s32.f32 %v271
    %v276 = vpack.c.bf16 %v273, %v272
    %v277 = vpack.c.bf16 %v275, %v274
    %s278 = scalar_lea.vmem [#allocation2], 32
    %v279 = vld [vmem:[%s278] sm:$0xf]
    %v280 = vld [vmem:[%s278 + $0x4] sm:$0xf]
    %v281 = vld [vmem:[%s278 + $0x8] sm:$0xf]
    %v282 = vld [vmem:[%s278 + $0xc] sm:$0xf]
    %v287 = vunpack.c.l.b16 %v279
    %v288 = vunpack.c.l.b16 %v280
    %v289 = vunpack.c.l.b16 %v281
    %v290 = vunpack.c.l.b16 %v282
    %v291 = vpack.c.b16 %v288, %v287
    %v292 = vpack.c.b16 %v290, %v289
    %v296 = vsel %vm129, %v276, 0
    %v299 = vsel %vm129, %v277, 0
    %301 = vmatprep.subr.bf16.mxu0 0
    %302 = vmatpush1.bf16.msra.mxu0 %v291
    %303 = vmatprep.subr.bf16.mxu0 0
    %304 = vmatpush1.bf16.msra.mxu0 %v292
    %305 = vmatprep.subr.bf16.mxu0 0
    %306 = vmatpush1.bf16.msra.mxu0 0
    %307 = vmatprep.subr.bf16.mxu0 0
    %308 = vmatpush1.bf16.msra.mxu0 0
    %309 = vmatprep.subr.bf16.mxu0 0
    %310 = vmatpush1.bf16.msra.mxu0 0
    %311 = vmatprep.subr.bf16.mxu0 0
    %312 = vmatpush1.bf16.msra.mxu0 0
    %313 = vmatprep.subr.bf16.mxu0 0
    %314 = vmatpush1.bf16.msra.mxu0 0
    %315 = vmatprep.subr.bf16.mxu0 0
    %316 = vmatpush1.bf16.msra.mxu0 0
    %317 = vmatprep.subr.bf16.mxu0 0
    %318 = vmatpush1.bf16.msra.mxu0 0
    %319 = vmatprep.subr.bf16.mxu0 0
    %320 = vmatpush1.bf16.msra.mxu0 0
    %321 = vmatprep.subr.bf16.mxu0 0
    %322 = vmatpush1.bf16.msra.mxu0 0
    %323 = vmatprep.subr.bf16.mxu0 0
    %324 = vmatpush1.bf16.msra.mxu0 0
    %325 = vmatprep.subr.bf16.mxu0 0
    %326 = vmatpush1.bf16.msra.mxu0 0
    %327 = vmatprep.subr.bf16.mxu0 0
    %328 = vmatpush1.bf16.msra.mxu0 0
    %329 = vmatprep.subr.bf16.mxu0 0
    %330 = vmatpush1.bf16.msra.mxu0 0
    %331 = vmatprep.subr.bf16.mxu0 0
    %332 = vmatpush1.bf16.msra.mxu0 0
    %333 = vmatprep.mubr.bf16.mxu0 0
    %334 = vmatmul.mubr.bf16.gmra.mrb[0].mxu0 %v296
    %v335 = vpop.f32.mrb[0].mxu0
    %v336 = vadd.f32 0.0, %v335
    %v337 = vpop.f32.mrb[0].mxu0
    %v338 = vpop.f32.mrb[0].mxu0
    %v339 = vadd.f32 0.0, %v338
    %v340 = vpop.f32.mrb[0].mxu0
    %341 = vmatprep.mubr.bf16.mxu0 0
    %342 = vmatmul.mubr.bf16.gmra.mrb[0].mxu0 %v299
    %v343 = vpop.f32.mrb[0].mxu0
    %v344 = vadd.f32 0.0, %v343
    %v345 = vpop.f32.mrb[0].mxu0
    %v346 = vpop.f32.mrb[0].mxu0
    %v347 = vadd.f32 0.0, %v346
    %v348 = vpop.f32.mrb[0].mxu0
    %349 = vdwg.mxu0
    %v350 = vadd.f32 %v238, %v336
    %v351 = vadd.f32 %v241, %v339
    %v352 = vadd.f32 %v246, %v344
    %v353 = vadd.f32 %v249, %v347
    %v354 = vld [vmem:[%s2] sm:$0x1]
    %v356 = vlaneseq
    %v357 = vshrl.u32 %v356, 7
    %v358 = vsub.s32 0, %v357
    %v359 = vrot.slane %v354, %v358
    %v361 = vadd.f32 %v350, %v359
    %v362 = vadd.f32 %v351, %v359
    %v363 = vadd.f32 %v352, %v359
    %v364 = vadd.f32 %v353, %v359
    %v365 = vmax.f32 %v361, 0.0
    %v366 = vmax.f32 %v362, 0.0
    %v367 = vmax.f32 %v363, 0.0
    %v368 = vmax.f32 %v364, 0.0
    %v369 = vlaneseq
    %v370 = vshrl.u32 %v369, 7
    %v371 = vadd.s32 %v370, 8
    %vm372 = vcmp.lt.s32.totalorder %v370, 14
    %vm373 = vcmp.lt.s32.totalorder %v371, 14
    %v374 = vsel %vm372, %v365, 0.0
    %v375 = vsel %vm373, %v366, 0.0
    %v376 = vsel %vm372, %v367, 0.0
    %v377 = vsel %vm373, %v368, 0.0
    %v378 = vmax.f32 %v374, %v375
    %v379 = vrot.slane %v378, 4
    %v380 = vmax.f32 %v378, %v379
    %v381 = vrot.slane %v380, 2
    %v382 = vmax.f32 %v380, %v381
    %v383 = vrot.slane %v382, 1
    %v384 = vmax.f32 %v382, %v383
    %v385 = vmax.f32 %v376, %v377
    %v386 = vrot.slane %v385, 4
    %v387 = vmax.f32 %v385, %v386
    %v388 = vrot.slane %v387, 2
    %v389 = vmax.f32 %v387, %v388
    %v390 = vrot.slane %v389, 1
    %v391 = vmax.f32 %v389, %v390
    %v392 = vld [vmem:[#allocation5] sm:$0xff]
    %v393 = vld [vmem:[#allocation5 + $0x8] sm:$0xff]
    %v394 = vld [vmem:[#allocation5 + $0x10] sm:$0xff]
    %v395 = vld [vmem:[#allocation5 + $0x18] sm:$0xff]
    %v396 = vld [vmem:[#allocation5 + $0x20] sm:$0xff]
    %v397 = vld [vmem:[#allocation5 + $0x28] sm:$0xff]
    %v398 = vld [vmem:[#allocation5 + $0x30] sm:$0xff]
    %v399 = vld [vmem:[#allocation5 + $0x38] sm:$0xff]
    %v400 = vld [vmem:[#allocation5 + $0x40] sm:$0xff]
    %v401 = vld [vmem:[#allocation5 + $0x48] sm:$0xff]
    %v402 = vld [vmem:[#allocation5 + $0x50] sm:$0xff]
    %v403 = vld [vmem:[#allocation5 + $0x58] sm:$0xff]
    %v404 = vld [vmem:[#allocation5 + $0x60] sm:$0xff]
    %v405 = vld [vmem:[#allocation5 + $0x68] sm:$0xff]
    %v406 = vld [vmem:[#allocation5 + $0x70] sm:$0xff]
    %v407 = vld [vmem:[#allocation5 + $0x78] sm:$0xff]
    %v408 = vld [vmem:[%s4] sm:$0x1]
    %v410 = vlaneseq
    %v411 = vshrl.u32 %v410, 7
    %v412 = vsub.s32 0, %v411
    %v413 = vrot.slane %v408, %v412
    %vm417 = vcmask 1041409
    %v418 = vsel %vm417, %v391, %v384
    %420 = vmatprep.subr.mxu0 0.0
    %421 = vmatpush1.msra.mxu0 %v392
    %422 = vmatprep.subr.mxu0 0.0
    %423 = vmatpush1.msra.mxu0 %v393
    %424 = vmatprep.subr.mxu0 0.0
    %425 = vmatpush1.msra.mxu0 %v394
    %426 = vmatprep.subr.mxu0 0.0
    %427 = vmatpush1.msra.mxu0 %v395
    %428 = vmatprep.subr.mxu0 0.0
    %429 = vmatpush1.msra.mxu0 %v396
    %430 = vmatprep.subr.mxu0 0.0
    %431 = vmatpush1.msra.mxu0 %v397
    %432 = vmatprep.subr.mxu0 0.0
    %433 = vmatpush1.msra.mxu0 %v398
    %434 = vmatprep.subr.mxu0 0.0
    %435 = vmatpush1.msra.mxu0 %v399
    %436 = vmatprep.subr.mxu0 0.0
    %437 = vmatpush1.msra.mxu0 %v400
    %438 = vmatprep.subr.mxu0 0.0
    %439 = vmatpush1.msra.mxu0 %v401
    %440 = vmatprep.subr.mxu0 0.0
    %441 = vmatpush1.msra.mxu0 %v402
    %442 = vmatprep.subr.mxu0 0.0
    %443 = vmatpush1.msra.mxu0 %v403
    %444 = vmatprep.subr.mxu0 0.0
    %445 = vmatpush1.msra.mxu0 %v404
    %446 = vmatprep.subr.mxu0 0.0
    %447 = vmatpush1.msra.mxu0 %v405
    %448 = vmatprep.subr.mxu0 0.0
    %449 = vmatpush1.msra.mxu0 %v406
    %450 = vmatprep.subr.mxu0 0.0
    %451 = vmatpush1.msra.mxu0 %v407
    %452 = vmatprep.subr.mxu0 0.0
    %453 = vmatpush1.msra.mxu0 0.0
    %454 = vmatprep.subr.mxu0 0.0
    %455 = vmatpush1.msra.mxu0 0.0
    %456 = vmatprep.subr.mxu0 0.0
    %457 = vmatpush1.msra.mxu0 0.0
    %458 = vmatprep.subr.mxu0 0.0
    %459 = vmatpush1.msra.mxu0 0.0
    %460 = vmatprep.subr.mxu0 0.0
    %461 = vmatpush1.msra.mxu0 0.0
    %462 = vmatprep.subr.mxu0 0.0
    %463 = vmatpush1.msra.mxu0 0.0
    %464 = vmatprep.subr.mxu0 0.0
    %465 = vmatpush1.msra.mxu0 0.0
    %466 = vmatprep.subr.mxu0 0.0
    %467 = vmatpush1.msra.mxu0 0.0
    %468 = vmatprep.subr.mxu0 0.0
    %469 = vmatpush1.msra.mxu0 0.0
    %470 = vmatprep.subr.mxu0 0.0
    %471 = vmatpush1.msra.mxu0 0.0
    %472 = vmatprep.subr.mxu0 0.0
    %473 = vmatpush1.msra.mxu0 0.0
    %474 = vmatprep.subr.mxu0 0.0
    %475 = vmatpush1.msra.mxu0 0.0
    %476 = vmatprep.subr.mxu0 0.0
    %477 = vmatpush1.msra.mxu0 0.0
    %478 = vmatprep.subr.mxu0 0.0
    %479 = vmatpush1.msra.mxu0 0.0
    %480 = vmatprep.subr.mxu0 0.0
    %481 = vmatpush1.msra.mxu0 0.0
    %482 = vmatprep.subr.mxu0 0.0
    %483 = vmatpush1.msra.mxu0 0.0
    %484 = vmatprep.mubr.f32.mxu0 0.0
    %485 = vmatmul.mubr.f32.gmra.mrb[0].mxu0 %v418
    %v486 = vpop.f32.mrb[0].mxu0
    %v487 = vadd.f32 %v413, %v486
    %v488 = vpop.f32.mrb[0].mxu0
    %489 = vdwg.mxu0
    %490 = vst [vmem:[#allocation7] sm:$0x3] %v487
    // Predicated region
    $region30: #{tpu_custom_call.1} parent=1 // pred_check
      _
    $region31: #{tpu_custom_call.1} parent=1 // pred_check_branch
      %492 = sbr.rel (0) target = $region33
    $region32: #{tpu_custom_call.1} parent=1 // pred_region
      %s494 = ssub.s32 32, 32
      %495 = vsyncadd [#allocation4], %s494
      %s497 = sshll.u32 [#allocation7], 4
      %s498 = int_to_ptr.vmem [resolvable:$true] %s497
      %500 = dma.vmem_to_hbm [thread:$0]  %s498, 32, %s5, [#allocation4]
    $region33: #{tpu_custom_call.1} parent=1 // pred_fallthru
      _
    // Predicated region
    $region34: #{tpu_custom_call.1} parent=1 // pred_check
      _
    $region35: #{tpu_custom_call.1} parent=1 // pred_check_branch
      %502 = sbr.rel (0) target = $region37
    $region36: #{tpu_custom_call.1} parent=1 // pred_region
      %503 = dma.done [#allocation4], 32
    $region37: #{tpu_custom_call.1} parent=1 // pred_fallthru
      _
    %504 = vsyncpa [#allocation3], 1
    %505 = vsyncpa [#allocation6], 1
    %506 = vsyncpa [#allocation4], 1

</llo_original>
